<compile_context>
chip_gen: v7x
topology: tpu7x:2x2x1
jax: 0.10.0
libtpu: 0.0.40
codegen_flags: <defaults>
</compile_context>

<pallas_src>
import jax
import jax.numpy as jnp
from jax import lax
from jax.experimental import pallas as pl
from jax.experimental.pallas import tpu as pltpu

_LANES = 128
_SUBLANES = 8
_NUM_CORES = 2          # v7x has 2 TensorCores; extra partial is harmless on v5e/v6e
_TILE_ROWS = 1024       # 512 KiB/tile f32 -> 2 inputs x 2 bufs ~= 2 MiB VMEM
_MAX_SINGLE_ROWS = 2048  # below this, one grid-less block handles everything


def _single_block_kernel(x_ref, y_ref, o_ref):
    # Whole problem in one lane-dense block: one DMA per operand, one
    # cross-lane reduce, one scalar SMEM store.  No grid bookkeeping at all.
    d = x_ref[...].astype(jnp.float32) - y_ref[...].astype(jnp.float32)
    o_ref[0, 0] = jnp.sum(d * d)


def _make_tiled_kernel(rows, tile_rows, blocks_per_core, total_blocks):
    # Static closure over the tiling so the kernel can mask ragged tails and
    # dummy (clamped) blocks without scalar-prefetch plumbing.
    ragged = (rows % tile_rows != 0) or (total_blocks % _NUM_CORES != 0)

    def kernel(x_ref, y_ref, o_ref, acc_ref):
        c = pl.program_id(0)
        i = pl.program_id(1)

        @pl.when(i == 0)
        def _():
            acc_ref[...] = jnp.zeros_like(acc_ref)

        d = x_ref[...].astype(jnp.float32) - y_ref[...].astype(jnp.float32)
        sq = d * d

        if ragged:
            # Rows past the real array (partial last block, or a dummy block the
            # index_map clamped back in-bounds) must contribute zero.  Mask by
            # the *unclamped* global row index; select happens before the
            # accumulate so garbage (even NaN) in the OOB pad never propagates.
            blk = c * blocks_per_core + i          # unclamped global block id
            row0 = blk * tile_rows
            local = lax.broadcasted_iota(jnp.int32, (tile_rows, _LANES), 0)
            sq = jnp.where(row0 + local < rows, sq, 0.0)

        # Fold into one vreg-sized accumulator: the reshape is tile-aligned
        # (no relayout); the axis-0 sum is plain VPU adds, so per-step
        # accumulator traffic is a single (8,128) read-modify-write.
        acc_ref[...] += jnp.sum(
            sq.reshape(tile_rows // _SUBLANES, _SUBLANES, _LANES), axis=0)

        @pl.when(i == pl.num_programs(1) - 1)
        def _():
            # One XLU cross-lane reduce + one scalar SMEM store per core.
            o_ref[0, 0] = jnp.sum(acc_ref[...])

    return kernel


def custom_loss(x, y, params):
    """params * mean((x - y)**2) with the reduction done in Pallas TPU kernels."""
    assert x.shape == y.shape, "x and y must have identical shapes"
    total = x.size

    # Lane-dense (rows, 128) view.  For contiguous inputs this reshape is free
    # (no extra HBM pass) and inputs stay at native width — the kernel casts
    # per tile.
    lanes_pad = (-total) % _LANES
    xf = x.reshape(-1)
    yf = y.reshape(-1)
    if lanes_pad:
        # Rare ragged case (total not a multiple of 128): minimal zero pad so
        # the 2-D reshape is legal; zero pads contribute 0 to the sum.
        # TODO(synk): stream the <128-element tail through a masked 1-D block
        # instead, to avoid this copying pad entirely.
        xf = jnp.pad(xf, (0, lanes_pad))
        yf = jnp.pad(yf, (0, lanes_pad))
    rows = (total + lanes_pad) // _LANES
    x2d = xf.reshape(rows, _LANES)
    y2d = yf.reshape(rows, _LANES)

    bytes_accessed = (x.size * x.dtype.itemsize
                      + y.size * y.dtype.itemsize
                      + 4 * _NUM_CORES)
    cost = pl.CostEstimate(flops=3 * total, transcendentals=0,
                           bytes_accessed=bytes_accessed)

    if rows <= _MAX_SINGLE_ROWS:
        # Toy / small sizes are pure fixed overhead: one invocation, no grid.
        ssum = pl.pallas_call(
            _single_block_kernel,
            out_shape=jax.ShapeDtypeStruct((1, 1), jnp.float32),
            in_specs=[pl.BlockSpec(memory_space=pltpu.MemorySpace.VMEM),
                      pl.BlockSpec(memory_space=pltpu.MemorySpace.VMEM)],
            out_specs=pl.BlockSpec(memory_space=pltpu.MemorySpace.SMEM),
            cost_estimate=cost,
        )(x2d, y2d)[0, 0]
    else:
        # HBM-bandwidth-bound streaming reduction.  Fixed large tiles + cdiv
        # grid + in-kernel masking: tile size never degrades for awkward row
        # counts.  Leading "parallel" axis splits the blocks across the two
        # TensorCores on v7x; each core produces its own SMEM partial sum.
        tile_rows = _TILE_ROWS
        total_blocks = pl.cdiv(rows, tile_rows)
        blocks_per_core = pl.cdiv(total_blocks, _NUM_CORES)

        def in_index(c, i):
            blk = c * blocks_per_core + i
            # Clamp dummy trailing blocks (when total_blocks isn't a multiple
            # of _NUM_CORES) to a valid block; the kernel masks them to zero.
            return (jnp.minimum(blk, total_blocks - 1), 0)

        kernel = _make_tiled_kernel(rows, tile_rows, blocks_per_core,
                                    total_blocks)
        partials = pl.pallas_call(
            kernel,
            out_shape=jax.ShapeDtypeStruct((_NUM_CORES, 1), jnp.float32),
            grid=(_NUM_CORES, blocks_per_core),
            in_specs=[pl.BlockSpec((tile_rows, _LANES), in_index),
                      pl.BlockSpec((tile_rows, _LANES), in_index)],
            out_specs=pl.BlockSpec((1, 1), lambda c, i: (c, 0),
                                   memory_space=pltpu.MemorySpace.SMEM),
            scratch_shapes=[pltpu.VMEM((_SUBLANES, _LANES), jnp.float32)],
            compiler_params=pltpu.CompilerParams(
                dimension_semantics=("parallel", "arbitrary")),
            cost_estimate=cost,
        )(x2d, y2d)
        ssum = jnp.sum(partials)

    # Scalar epilogue (mean + params scale) stays in the wrapper.
    p = jnp.asarray(params, dtype=jnp.float32)
    return p * ssum / jnp.float32(total)


if __name__ == "__main__":
    key = jax.random.PRNGKey(0)
    kx, ky = jax.random.split(key)

    # Small NCHW input consistent with the module: batch=2, channels=4, 16x16.
    x = jax.random.normal(kx, (2, 4, 16, 16), dtype=jnp.float32)
    y = jax.random.normal(ky, (2, 4, 16, 16), dtype=jnp.float32)
    params = jnp.float32(2.5)

    loss = custom_loss(x, y, params)
    jax.block_until_ready(loss)
    ref = params * jnp.mean((x - y) ** 2)
    assert jnp.allclose(loss, ref, rtol=1e-5, atol=1e-6), (loss, ref)

    # Also exercise the tiled (large-input) path: native bf16 streaming, a
    # partial last 1024-row block and an odd block count (one masked dummy
    # block on the second core's schedule).
    kx2, ky2 = jax.random.split(ky)
    xl = jax.random.normal(kx2, (2080, 128), dtype=jnp.bfloat16)
    yl = jax.random.normal(ky2, (2080, 128), dtype=jnp.bfloat16)
    loss_l = custom_loss(xl, yl, jnp.float32(0.5))
    jax.block_until_ready(loss_l)
    ref_l = 0.5 * jnp.mean(
        (xl.astype(jnp.float32) - yl.astype(jnp.float32)) ** 2)
    assert jnp.allclose(loss_l, ref_l, rtol=1e-3, atol=1e-5), (loss_l, ref_l)

    print("KERNEL_OK")
</pallas_src>

<mosaic_0001>
module attributes {stable_mosaic.version = 11 : i64} {
  func.func @_single_block_kernel(%arg0: memref<16x128xf32, #tpu.memory_space<vmem>>, %arg1: memref<16x128xf32, #tpu.memory_space<vmem>>, %arg2: memref<1x1xf32, #tpu.memory_space<smem>>) attributes {dimension_semantics = [], scalar_prefetch = 0 : i64, scratch_operands = 0 : i64, tpu.core_type = #tpu.core_type<tc>} {
    %c0 = arith.constant 0 : index
    %c0_0 = arith.constant 0 : index
    %0 = vector.load %arg0[%c0, %c0_0] : memref<16x128xf32, #tpu.memory_space<vmem>>, vector<16x128xf32>
    %c0_1 = arith.constant 0 : index
    %c0_2 = arith.constant 0 : index
    %1 = vector.load %arg1[%c0_1, %c0_2] : memref<16x128xf32, #tpu.memory_space<vmem>>, vector<16x128xf32>
    %2 = arith.subf %0, %1 : vector<16x128xf32>
    %3 = arith.mulf %2, %2 : vector<16x128xf32>
    %4 = vector.shape_cast %3 : vector<16x128xf32> to vector<1x16x128xf32>
    %cst = arith.constant dense<0.000000e+00> : vector<1xf32>
    %5 = vector.multi_reduction <add>, %4, %cst [1, 2] : vector<1x16x128xf32> to vector<1xf32>
    %6 = vector.shape_cast %5 : vector<1xf32> to vector<1x1x1xf32>
    %7 = vector.extract %6[0, 0, 0] : f32 from vector<1x1x1xf32>
    %c0_3 = arith.constant 0 : index
    %c0_4 = arith.constant 0 : index
    %8 = memref.load %arg2[%c0_3, %c0_4] : memref<1x1xf32, #tpu.memory_space<smem>>
    memref.store %7, %arg2[%c0_3, %c0_4] : memref<1x1xf32, #tpu.memory_space<smem>>
    return
  }
}

</mosaic_0001>

<llo_original>
// kernel: tpu_custom_call.1
$region0: #{tpu_custom_call.1}
  #allocation0 [shape = 'u32[]', space=smem, size = 0x4, offset = 0x4, fixed_abs, tag = 'smem constant byte address 0x4 - core index']
  #allocation1 [shape = 'u32[144,128]{1,0:T(1,128)}', space=vmem, size = 0x12000, scoped, tag = 'internal scratch']
  %s0 = inlined_call_operand.hbm [shape: f32[16,128], index: 0, kind: input, shape index: {}]
  %s1 = inlined_call_operand.hbm [shape: f32[16,128], index: 1, kind: input, shape index: {}]
  %s2 = inlined_call_operand.hbm [shape: f32[1,1], index: 2, kind: output, shape index: {}]
  %s3 = sld [smem:[#allocation0]]
  $region26: #{tpu_custom_call.1} parent=0
    _
  %s5 = ssub.s32 1, %s3
  %s6 = scalar_select 0, %s5, %s3
  $region1: #{tpu_custom_call.1} parent=0
    #allocation2 [shape = 'u8[8192]{0}', space=vmem, size = 0x2000, scoped, tag = 'input window, operand 0, single buffered']
    #allocation3 [shape = 's32[1]{0}', space=sflag, size = 0x4, scoped, tag = 'scoped memory for tpu_custom_call.1']
    #allocation4 [shape = 's32[1]{0}', space=sflag, size = 0x4, scoped, tag = 'scoped memory for tpu_custom_call.1']
    #allocation5 [shape = 'u8[8192]{0}', space=vmem, size = 0x2000, scoped, tag = 'input window, operand 1, single buffered']
    #allocation6 [shape = 's32[1]{0}', space=sflag, size = 0x4, scoped, tag = 'scoped memory for tpu_custom_call.1']
    #allocation7 [shape = 'u8[512]{0}', space=smem, size = 0x200, scoped, tag = 'output window, operand 0, single buffered']
    %7 = vsyncpa [#allocation3], 0
    %8 = vsyncpa [#allocation6], 0
    %9 = vsyncpa [#allocation4], 0
    // Predicated region
    $region2: #{tpu_custom_call.1} parent=1 // pred_check
      _
    $region3: #{tpu_custom_call.1} parent=1 // pred_check_branch
      %11 = sbr.rel (0) target = $region5
    $region4: #{tpu_custom_call.1} parent=1 // pred_region
      %s13 = ssub.s32 256, 256
      %14 = vsyncadd [#allocation3], %s13
      %s15 = sshll.u32 [#allocation2], 4
      %s16 = int_to_ptr.vmem [resolvable:$true] %s15
      %21 = dma.hbm_to_vmem [thread:$0]  %s0, 256, %s16, [#allocation3], 128, 128, 8
    $region5: #{tpu_custom_call.1} parent=1 // pred_fallthru
      _
    // Predicated region
    $region6: #{tpu_custom_call.1} parent=1 // pred_check
      _
    $region7: #{tpu_custom_call.1} parent=1 // pred_check_branch
      %23 = sbr.rel (0) target = $region9
    $region8: #{tpu_custom_call.1} parent=1 // pred_region
      %s25 = ssub.s32 256, 256
      %26 = vsyncadd [#allocation6], %s25
      %s27 = sshll.u32 [#allocation5], 4
      %s28 = int_to_ptr.vmem [resolvable:$true] %s27
      %33 = dma.hbm_to_vmem [thread:$0]  %s1, 256, %s28, [#allocation6], 128, 128, 8
    $region9: #{tpu_custom_call.1} parent=1 // pred_fallthru
      _
    // Predicated region
    $region10: #{tpu_custom_call.1} parent=1 // pred_check
      _
    $region11: #{tpu_custom_call.1} parent=1 // pred_check_branch
      %35 = sbr.rel (0) target = $region13
    $region12: #{tpu_custom_call.1} parent=1 // pred_region
      %36 = dma.done [#allocation3], 256
    $region13: #{tpu_custom_call.1} parent=1 // pred_fallthru
      _
    // Predicated region
    $region14: #{tpu_custom_call.1} parent=1 // pred_check
      _
    $region15: #{tpu_custom_call.1} parent=1 // pred_check_branch
      %38 = sbr.rel (0) target = $region17
    $region16: #{tpu_custom_call.1} parent=1 // pred_region
      %39 = dma.done [#allocation6], 256
    $region17: #{tpu_custom_call.1} parent=1 // pred_fallthru
      _
    %v40 = vld [vmem:[#allocation2] sm:$0xff]
    %v41 = vld [vmem:[#allocation2 + $0x8] sm:$0xff]
    %v42 = vld [vmem:[#allocation5] sm:$0xff]
    %v43 = vld [vmem:[#allocation5 + $0x8] sm:$0xff]
    %v44 = vsub.f32 %v40, %v42
    %v45 = vsub.f32 %v41, %v43
    %v46 = vmul.f32 %v44, %v44
    %v47 = vmul.f32 %v45, %v45
    %v48 = vadd.f32 %v46, %v47
    %49 = vadd.xlane.f32.xlu0 %v48
    %v50 = vpop.xlane.xlu0 %49
    %v51 = vrot.slane %v50, 4
    %v52 = vadd.f32 %v50, %v51
    %v53 = vrot.slane %v52, 2
    %v54 = vadd.f32 %v52, %v53
    %v55 = vrot.slane %v54, 1
    %v56 = vadd.f32 %v54, %v55
    %s57 = vtos %v56
    %s58 = scalar_lea.smem [#allocation7], 0
    %59 = sst [smem:[%s58]] %s57
    // Predicated region
    $region18: #{tpu_custom_call.1} parent=1 // pred_check
      _
    $region19: #{tpu_custom_call.1} parent=1 // pred_check_branch
      %61 = sbr.rel (0) target = $region21
    $region20: #{tpu_custom_call.1} parent=1 // pred_region
      %s63 = ssub.s32 16, 16
      %64 = vsyncadd [#allocation4], %s63
      %67 = dma.smem_to_hbm [#allocation7], 16, %s2, [#allocation4]
    $region21: #{tpu_custom_call.1} parent=1 // pred_fallthru
      _
    // Predicated region
    $region22: #{tpu_custom_call.1} parent=1 // pred_check
      _
    $region23: #{tpu_custom_call.1} parent=1 // pred_check_branch
      %69 = sbr.rel (0) target = $region25
    $region24: #{tpu_custom_call.1} parent=1 // pred_region
      %70 = dma.done [#allocation4], 16
    $region25: #{tpu_custom_call.1} parent=1 // pred_fallthru
      _
    %71 = sfence
    %72 = vsyncpa [#allocation3], 1
    %73 = vsyncpa [#allocation6], 1
    %74 = vsyncpa [#allocation4], 1

</llo_original>
